<compile_context>
chip_gen: v6e
topology: v6e:2x2x1
jax: 0.10.0
libtpu: 0.0.40
codegen_flags: <defaults>
</compile_context>

<pallas_src>
import jax
import jax.numpy as jnp
from jax import lax
from jax.experimental import pallas as pl
from jax.experimental.pallas import tpu as pltpu


def _round_up(x: int, m: int) -> int:
    return ((x + m - 1) // m) * m


def _make_tied_linear_kernel(transpose: bool, compute_dtype):
    """Build the kernel body for a given weight layout.

    transpose=True  : weight tile is (tk, tn)  -> contract x dim 1 with w dim 0
    transpose=False : weight tile is (tn, tk)  -> contract x dim 1 with w dim 1
                      (native trans_b contraction on the MXU; no materialized
                       transpose of the stored (out, in) weight).
    """
    if transpose:
        dim_numbers = (((1,), (0,)), ((), ()))
    else:
        dim_numbers = (((1,), (1,)), ((), ()))

    def kernel(x_ref, w_ref, o_ref, acc_ref):
        # x_ref: (tm, tk); w_ref: (tk, tn) or (tn, tk); o_ref/acc_ref: (tm, tn)
        @pl.when(pl.program_id(2) == 0)
        def _():
            acc_ref[...] = jnp.zeros_like(acc_ref)

        a = x_ref[...]
        b = w_ref[...]
        if compute_dtype is not None:
            a = a.astype(compute_dtype)
            b = b.astype(compute_dtype)

        acc_ref[...] += lax.dot_general(
            a, b, dim_numbers, preferred_element_type=jnp.float32
        )

        @pl.when(pl.program_id(2) == pl.num_programs(2) - 1)
        def _():
            o_ref[...] = acc_ref[...].astype(o_ref.dtype)

    return kernel


def tied_linear(
    x,
    weight,
    transpose: bool,
    *,
    tm: int = 256,
    tn: int = 512,
    tk: int = 512,
    compute_dtype=jnp.bfloat16,
):
    """Equivalent of F.linear(x, weight.t() if transpose else weight).

    x:      (..., in_features)
    weight: (out_features, in_features) if transpose=False
            (in_features, out_features) if transpose=True   (tied-weight case)
    compute_dtype: dtype for the MXU operands (None = keep input dtype).
                   Accumulation is always f32.
    """
    *lead, K = x.shape
    if transpose:
        assert weight.shape[0] == K, "weight must be (in_features, out_features)"
        N = weight.shape[1]
    else:
        assert weight.shape[1] == K, "weight must be (out_features, in_features)"
        N = weight.shape[0]

    x2d = x.reshape(-1, K)
    M = x2d.shape[0]

    # Effective tile sizes: clip to the (aligned) problem size, keep (8,128)
    # alignment for the last-two-dim constraint and MXU friendliness.
    tm_e = min(tm, _round_up(max(M, 1), 8))
    tn_e = min(tn, _round_up(max(N, 1), 128))
    tk_e = min(tk, _round_up(max(K, 1), 128))

    Mp = _round_up(M, tm_e)
    Np = _round_up(N, tn_e)
    Kp = _round_up(K, tk_e)

    # Zero-pad to tile multiples (zeros in K contribute nothing to the dot;
    # padded M rows / N cols are sliced off afterwards). For production
    # lm_head-style shapes (K, N multiples of 128) this is a no-op.
    if (Mp, Kp) != (M, K):
        x2d = jnp.pad(x2d, ((0, Mp - M), (0, Kp - K)))

    if transpose:
        # stored (K, N)
        if weight.shape != (Kp, Np):
            weight = jnp.pad(weight, ((0, Kp - K), (0, Np - N)))
        w_spec = pl.BlockSpec((tk_e, tn_e), lambda i, j, k: (k, j))
    else:
        # stored (N, K) -- fed as-is, contracted trans_b-style in kernel.
        if weight.shape != (Np, Kp):
            weight = jnp.pad(weight, ((0, Np - N), (0, Kp - K)))
        w_spec = pl.BlockSpec((tn_e, tk_e), lambda i, j, k: (j, k))

    kernel = _make_tied_linear_kernel(transpose, compute_dtype)

    cost = pl.CostEstimate(
        flops=2 * Mp * Np * Kp,
        transcendentals=0,
        bytes_accessed=(
            x2d.size * x2d.dtype.itemsize
            + weight.size * weight.dtype.itemsize
            + Mp * Np * x.dtype.itemsize
        ),
    )

    out2d = pl.pallas_call(
        kernel,
        out_shape=jax.ShapeDtypeStruct((Mp, Np), x.dtype),
        grid_spec=pltpu.PrefetchScalarGridSpec(
            num_scalar_prefetch=0,
            grid=(Mp // tm_e, Np // tn_e, Kp // tk_e),
            in_specs=[
                pl.BlockSpec((tm_e, tk_e), lambda i, j, k: (i, k)),  # x tile
                w_spec,                                              # weight tile
            ],
            out_specs=pl.BlockSpec((tm_e, tn_e), lambda i, j, k: (i, j)),
            scratch_shapes=[pltpu.VMEM((tm_e, tn_e), jnp.float32)],
        ),
        compiler_params=pltpu.CompilerParams(
            dimension_semantics=("parallel", "parallel", "arbitrary")
        ),
        cost_estimate=cost,
    )(x2d, weight)

    out2d = out2d[:M, :N]
    return out2d.reshape(*lead, N)


if __name__ == "__main__":
    key = jax.random.PRNGKey(0)
    k_x, k_w = jax.random.split(key)

    # Small shapes, deliberately NOT multiples of the tile sizes to exercise
    # the padding path: x is (batch, seq, in_features).
    batch, seq = 2, 8
    in_features = 40
    out_features = 48

    x = jax.random.normal(k_x, (batch, seq, in_features), dtype=jnp.float32)
    # PyTorch nn.Linear convention: weight stored (out_features, in_features).
    weight = (
        jax.random.normal(k_w, (out_features, in_features), dtype=jnp.float32) * 0.05
    )

    # transpose=False path: F.linear(x, weight) = x @ weight.T
    out_f = tied_linear(x, weight, transpose=False)
    ref_f = x @ weight.T

    # transpose=True path: tied weight stored as (in_features, out_features);
    # F.linear(x, weight_t.t()) = x @ weight_t
    weight_t = weight.T
    out_t = tied_linear(x, weight_t, transpose=True)
    ref_t = x @ weight_t

    jax.block_until_ready((out_f, out_t))

    assert out_f.shape == (batch, seq, out_features)
    assert out_t.shape == (batch, seq, out_features)
    # bf16 MXU operands with f32 accumulation -> compare against the f32
    # reference with a correspondingly looser tolerance.
    assert jnp.allclose(out_f, ref_f, atol=2e-2, rtol=2e-2)
    assert jnp.allclose(out_t, ref_t, atol=2e-2, rtol=2e-2)

    print("KERNEL_OK")
</pallas_src>

<mosaic_0001>
module attributes {stable_mosaic.version = 11 : i64} {
  func.func @kernel(%arg0: i32, %arg1: i32, %arg2: i32, %arg3: memref<16x128xf32, #tpu.memory_space<vmem>>, %arg4: memref<128x128xf32, #tpu.memory_space<vmem>>, %arg5: memref<16x128xf32, #tpu.memory_space<vmem>>, %arg6: memref<16x128xf32, #tpu.memory_space<vmem>>) attributes {dimension_semantics = [#tpu.dimension_semantics<parallel>, #tpu.dimension_semantics<parallel>, #tpu.dimension_semantics<arbitrary>], iteration_bounds = array<i64: 1, 1, 1>, scalar_prefetch = 0 : i64, scratch_operands = 1 : i64, tpu.core_type = #tpu.core_type<tc>, window_params = [{transform_indices = @transform_0, window_bounds = array<i64: 16, 128>}, {transform_indices = @transform_1, window_bounds = array<i64: 128, 128>}, {transform_indices = @transform_2, window_bounds = array<i64: 16, 128>}]} {
    %c0_i32 = arith.constant 0 : i32
    %0 = arith.cmpi eq, %arg2, %c0_i32 : i32
    %1 = arith.extui %0 : i1 to i32
    %c0_i32_0 = arith.constant 0 : i32
    %2 = arith.cmpi ne, %1, %c0_i32_0 : i32
    scf.if %2 {
      %cst_10 = arith.constant 0.000000e+00 : f32
      %14 = vector.broadcast %cst_10 : f32 to vector<16x128xf32>
      %c0_11 = arith.constant 0 : index
      %c0_12 = arith.constant 0 : index
      %15 = vector.load %arg6[%c0_11, %c0_12] : memref<16x128xf32, #tpu.memory_space<vmem>>, vector<16x128xf32>
      tpu.vector_store %arg6[%c0_11, %c0_12], %14 {strides = array<i32>} : memref<16x128xf32, #tpu.memory_space<vmem>>, vector<16x128xf32>,
    } else {
    }
    %c0 = arith.constant 0 : index
    %c0_1 = arith.constant 0 : index
    %3 = vector.load %arg3[%c0, %c0_1] : memref<16x128xf32, #tpu.memory_space<vmem>>, vector<16x128xf32>
    %c0_2 = arith.constant 0 : index
    %c0_3 = arith.constant 0 : index
    %4 = vector.load %arg4[%c0_2, %c0_3] : memref<128x128xf32, #tpu.memory_space<vmem>>, vector<128x128xf32>
    %5 = arith.truncf %3 : vector<16x128xf32> to vector<16x128xbf16>
    %6 = arith.truncf %4 : vector<128x128xf32> to vector<128x128xbf16>
    %c0_4 = arith.constant 0 : index
    %c0_5 = arith.constant 0 : index
    %7 = vector.load %arg6[%c0_4, %c0_5] : memref<16x128xf32, #tpu.memory_space<vmem>>, vector<16x128xf32>
    %cst = arith.constant dense<0.000000e+00> : vector<16x128xf32>
    %8 = tpu.matmul %5, %6, %cst {dimension_numbers = #tpu.dot_dimension_numbers<[1], [1], [0], [0], [0, 0, 1, 0], [], []>} : vector<16x128xbf16>, vector<128x128xbf16>, vector<16x128xf32> -> vector<16x128xf32>
    %9 = arith.addf %7, %8 : vector<16x128xf32>
    %c0_6 = arith.constant 0 : index
    %c0_7 = arith.constant 0 : index
    %10 = vector.load %arg6[%c0_6, %c0_7] : memref<16x128xf32, #tpu.memory_space<vmem>>, vector<16x128xf32>
    tpu.vector_store %arg6[%c0_6, %c0_7], %9 {strides = array<i32>} : memref<16x128xf32, #tpu.memory_space<vmem>>, vector<16x128xf32>,
    %c0_i32_8 = arith.constant 0 : i32
    %11 = arith.cmpi eq, %arg2, %c0_i32_8 : i32
    %12 = arith.extui %11 : i1 to i32
    %c0_i32_9 = arith.constant 0 : i32
    %13 = arith.cmpi ne, %12, %c0_i32_9 : i32
    scf.if %13 {
      %c0_10 = arith.constant 0 : index
      %c0_11 = arith.constant 0 : index
      %14 = vector.load %arg6[%c0_10, %c0_11] : memref<16x128xf32, #tpu.memory_space<vmem>>, vector<16x128xf32>
      %c0_12 = arith.constant 0 : index
      %c0_13 = arith.constant 0 : index
      %15 = vector.load %arg5[%c0_12, %c0_13] : memref<16x128xf32, #tpu.memory_space<vmem>>, vector<16x128xf32>
      tpu.vector_store %arg5[%c0_12, %c0_13], %14 {strides = array<i32>} : memref<16x128xf32, #tpu.memory_space<vmem>>, vector<16x128xf32>,
    } else {
    }
    return
  }
  func.func @transform_0(%arg0: i32, %arg1: i32, %arg2: i32) -> (i32, i32) {
    %c0_i32 = arith.constant 0 : i32
    return %arg0, %arg2 : i32, i32
  }
  func.func @transform_1(%arg0: i32, %arg1: i32, %arg2: i32) -> (i32, i32) {
    %c0_i32 = arith.constant 0 : i32
    return %arg1, %arg2 : i32, i32
  }
  func.func @transform_2(%arg0: i32, %arg1: i32, %arg2: i32) -> (i32, i32) {
    %c0_i32 = arith.constant 0 : i32
    return %arg0, %arg1 : i32, i32
  }
}

</mosaic_0001>

<llo_original>
// kernel: tpu_custom_call.1
$region0: #{tpu_custom_call.1}
  #allocation0 [shape = 'u32[]', space=smem, size = 0x4, offset = 0x4, fixed_abs, tag = 'smem constant byte address 0x4 - core index']
  #allocation1 [shape = 'u32[144,128]{1,0:T(1,128)}', space=vmem, size = 0x12000, scoped, tag = 'internal scratch']
  #allocation2 [shape = 'f32[16,128]{1,0:T(8,128)}', space=vmem, size = 0x2000, scoped, tag = 'scratch operand']
  %s0 = inlined_call_operand.hbm [shape: f32[16,128], index: 0, kind: input, shape index: {}]
  %s1 = inlined_call_operand.hbm [shape: f32[128,128], index: 1, kind: input, shape index: {}]
  %s2 = inlined_call_operand.hbm [shape: f32[16,128], index: 2, kind: output, shape index: {}]
  %s3 = sld [smem:[#allocation0]]
  $region34: #{tpu_custom_call.1} parent=0
    _
  %s5 = ssub.s32 1, %s3
  %s6 = scalar_select 0, %s5, %s3
  $region1: #{tpu_custom_call.1} parent=0
    #allocation3 [shape = 'u8[8192]{0}', space=vmem, size = 0x2000, scoped, tag = 'input window, operand 0, single buffered']
    #allocation4 [shape = 's32[1]{0}', space=sflag, size = 0x4, scoped, tag = 'scoped memory for tpu_custom_call.1']
    #allocation5 [shape = 's32[1]{0}', space=sflag, size = 0x4, scoped, tag = 'scoped memory for tpu_custom_call.1']
    #allocation6 [shape = 'u8[65536]{0}', space=vmem, size = 0x10000, scoped, tag = 'input window, operand 1, single buffered']
    #allocation7 [shape = 's32[1]{0}', space=sflag, size = 0x4, scoped, tag = 'scoped memory for tpu_custom_call.1']
    #allocation8 [shape = 'u8[8192]{0}', space=vmem, size = 0x2000, scoped, tag = 'output window, operand 0, single buffered']
    %7 = vsyncpa [#allocation4], 0
    %8 = vsyncpa [#allocation7], 0
    %9 = vsyncpa [#allocation5], 0
    // Predicated region
    $region2: #{tpu_custom_call.1} parent=1 // pred_check
      _
    $region3: #{tpu_custom_call.1} parent=1 // pred_check_branch
      %11 = sbr.rel (0) target = $region5
    $region4: #{tpu_custom_call.1} parent=1 // pred_region
      %s13 = ssub.s32 256, 256
      %14 = vsyncadd [#allocation4], %s13
      %s15 = sshll.u32 [#allocation3], 4
      %s16 = int_to_ptr.vmem [resolvable:$true] %s15
      %21 = dma.hbm_to_vmem [thread:$0]  %s0, 256, %s16, [#allocation4], 128, 128, 8
    $region5: #{tpu_custom_call.1} parent=1 // pred_fallthru
      _
    // Predicated region
    $region6: #{tpu_custom_call.1} parent=1 // pred_check
      _
    $region7: #{tpu_custom_call.1} parent=1 // pred_check_branch
      %23 = sbr.rel (0) target = $region9
    $region8: #{tpu_custom_call.1} parent=1 // pred_region
      %s25 = ssub.s32 2048, 2048
      %26 = vsyncadd [#allocation7], %s25
      %s27 = sshll.u32 [#allocation6], 4
      %s28 = int_to_ptr.vmem [resolvable:$true] %s27
      %33 = dma.hbm_to_vmem [thread:$0]  %s1, 2048, %s28, [#allocation7], 128, 128, 8
    $region9: #{tpu_custom_call.1} parent=1 // pred_fallthru
      _
    // Predicated region
    $region10: #{tpu_custom_call.1} parent=1 // pred_check
      _
    $region11: #{tpu_custom_call.1} parent=1 // pred_check_branch
      %35 = sbr.rel (0) target = $region13
    $region12: #{tpu_custom_call.1} parent=1 // pred_region
      %36 = dma.done [#allocation4], 256
    $region13: #{tpu_custom_call.1} parent=1 // pred_fallthru
      _
    // Predicated region
    $region14: #{tpu_custom_call.1} parent=1 // pred_check
      _
    $region15: #{tpu_custom_call.1} parent=1 // pred_check_branch
      %38 = sbr.rel (0) target = $region17
    $region16: #{tpu_custom_call.1} parent=1 // pred_region
      %39 = dma.done [#allocation7], 2048
    $region17: #{tpu_custom_call.1} parent=1 // pred_fallthru
      _
    %p41 = scmp.eq.s32.totalorder 0, 0
    // Predicated region
    $region18: #{tpu_custom_call.1} parent=1 // pred_check
      %p42 = pneg %p41
    $region19: #{tpu_custom_call.1} parent=1 // pred_check_branch
      %44 = sbr.rel (%p42) target = $region21
    $region20: #{tpu_custom_call.1} parent=1 // pred_region
      %45 = vst [vmem:[#allocation2] sm:$0xff] 0.0
      %46 = vst [vmem:[#allocation2 + $0x8] sm:$0xff] 0.0
    $region21: #{tpu_custom_call.1} parent=1 // pred_fallthru
      _
    %v47 = vld [vmem:[#allocation3] sm:$0xff]
    %v48 = vld [vmem:[#allocation3 + $0x8] sm:$0xff]
    %v49 = vld [vmem:[#allocation6] sm:$0xff]
    %v50 = vld [vmem:[#allocation6 + $0x8] sm:$0xff]
    %v51 = vld [vmem:[#allocation6 + $0x10] sm:$0xff]
    %v52 = vld [vmem:[#allocation6 + $0x18] sm:$0xff]
    %v53 = vld [vmem:[#allocation6 + $0x20] sm:$0xff]
    %v54 = vld [vmem:[#allocation6 + $0x28] sm:$0xff]
    %v55 = vld [vmem:[#allocation6 + $0x30] sm:$0xff]
    %v56 = vld [vmem:[#allocation6 + $0x38] sm:$0xff]
    %v57 = vld [vmem:[#allocation6 + $0x40] sm:$0xff]
    %v58 = vld [vmem:[#allocation6 + $0x48] sm:$0xff]
    %v59 = vld [vmem:[#allocation6 + $0x50] sm:$0xff]
    %v60 = vld [vmem:[#allocation6 + $0x58] sm:$0xff]
    %v61 = vld [vmem:[#allocation6 + $0x60] sm:$0xff]
    %v62 = vld [vmem:[#allocation6 + $0x68] sm:$0xff]
    %v63 = vld [vmem:[#allocation6 + $0x70] sm:$0xff]
    %v64 = vld [vmem:[#allocation6 + $0x78] sm:$0xff]
    %v65 = vpack.c.bf16 %v48, %v47
    %v66 = vpack.c.bf16 %v50, %v49
    %v67 = vpack.c.bf16 %v52, %v51
    %v68 = vpack.c.bf16 %v54, %v53
    %v69 = vpack.c.bf16 %v56, %v55
    %v70 = vpack.c.bf16 %v58, %v57
    %v71 = vpack.c.bf16 %v60, %v59
    %v72 = vpack.c.bf16 %v62, %v61
    %v73 = vpack.c.bf16 %v64, %v63
    %v74 = vld [vmem:[#allocation2] sm:$0xff]
    %v75 = vld [vmem:[#allocation2 + $0x8] sm:$0xff]
    %76 = vmatprep.subr.bf16.mxu0 0
    %77 = vmatpush1.bf16.xpose.msra.mxu0 %v73
    %78 = vmatprep.subr.bf16.mxu0 0
    %79 = vmatpush1.bf16.xpose.msra.mxu0 %v72
    %80 = vmatprep.subr.bf16.mxu0 0
    %81 = vmatpush1.bf16.xpose.msra.mxu0 %v71
    %82 = vmatprep.subr.bf16.mxu0 0
    %83 = vmatpush1.bf16.xpose.msra.mxu0 %v70
    %84 = vmatprep.subr.bf16.mxu0 0
    %85 = vmatpush1.bf16.xpose.msra.mxu0 %v69
    %86 = vmatprep.subr.bf16.mxu0 0
    %87 = vmatpush1.bf16.xpose.msra.mxu0 %v68
    %88 = vmatprep.subr.bf16.mxu0 0
    %89 = vmatpush1.bf16.xpose.msra.mxu0 %v67
    %90 = vmatprep.subr.bf16.mxu0 0
    %91 = vmatpush1.bf16.xpose.msra.mxu0 %v66
    %92 = vmatprep.subr.bf16.mxu0 0
    %93 = vmatpush2.bf16.xpose.msra.mxu0 0
    %94 = vmatprep.subr.bf16.mxu0 0
    %95 = vmatpush2.bf16.xpose.msra.mxu0 0
    %96 = vmatprep.subr.bf16.mxu0 0
    %97 = vmatpush2.bf16.xpose.msra.mxu0 0
    %98 = vmatprep.subr.bf16.mxu0 0
    %99 = vmatpush2.bf16.xpose.msra.mxu0 0
    %100 = vmatprep.subr.bf16.mxu0 0
    %101 = vmatpush2.bf16.xpose.msra.mxu0 0
    %102 = vmatprep.subr.bf16.mxu0 0
    %103 = vmatpush2.bf16.xpose.msra.mxu0 0
    %104 = vmatprep.subr.bf16.mxu0 0
    %105 = vmatpush2.bf16.xpose.msra.mxu0 0
    %106 = vmatprep.subr.bf16.mxu0 0
    %107 = vmatpush2.bf16.xpose.msra.mxu0 0
    %108 = vmatprep.mubr.bf16.mxu0 0
    %109 = vmatmul.mubr.bf16.gmra.mxu0 %v65
    %v110 = vpop.f32.mrf.mxu0
    %v111 = vadd.f32 0.0, %v110
    %v112 = vpop.f32.mrf.mxu0
    %v113 = vpop.f32.mrf.mxu0
    %v114 = vadd.f32 0.0, %v113
    %v115 = vpop.f32.mrf.mxu0
    %116 = vdwg.mxu0
    %v117 = vadd.f32 %v74, %v111
    %v118 = vadd.f32 %v75, %v114
    %119 = vst [vmem:[#allocation2] sm:$0xff] %v117
    %120 = vst [vmem:[#allocation2 + $0x8] sm:$0xff] %v118
    // Predicated region
    $region22: #{tpu_custom_call.1} parent=1 // pred_check
      %p121 = pneg %p41
    $region23: #{tpu_custom_call.1} parent=1 // pred_check_branch
      %123 = sbr.rel (%p121) target = $region25
    $region24: #{tpu_custom_call.1} parent=1 // pred_region
      %v124 = vld [vmem:[#allocation2] sm:$0xff]
      %v125 = vld [vmem:[#allocation2 + $0x8] sm:$0xff]
      %126 = vst [vmem:[#allocation8] sm:$0xff] %v124
      %127 = vst [vmem:[#allocation8 + $0x8] sm:$0xff] %v125
    $region25: #{tpu_custom_call.1} parent=1 // pred_fallthru
      _
    // Predicated region
    $region26: #{tpu_custom_call.1} parent=1 // pred_check
      _
    $region27: #{tpu_custom_call.1} parent=1 // pred_check_branch
      %129 = sbr.rel (0) target = $region29
    $region28: #{tpu_custom_call.1} parent=1 // pred_region
      %s131 = ssub.s32 256, 256
      %132 = vsyncadd [#allocation5], %s131
      %s133 = sshll.u32 [#allocation8], 4
      %s134 = int_to_ptr.vmem [resolvable:$true] %s133
      %139 = dma.vmem_to_hbm [thread:$0]  %s134, 256, %s2, [#allocation5], 128, 128, 8
    $region29: #{tpu_custom_call.1} parent=1 // pred_fallthru
      _
    // Predicated region
    $region30: #{tpu_custom_call.1} parent=1 // pred_check
      _
    $region31: #{tpu_custom_call.1} parent=1 // pred_check_branch
      %141 = sbr.rel (0) target = $region33
    $region32: #{tpu_custom_call.1} parent=1 // pred_region
      %142 = dma.done [#allocation5], 256
    $region33: #{tpu_custom_call.1} parent=1 // pred_fallthru
      _
    %143 = vsyncpa [#allocation4], 1
    %144 = vsyncpa [#allocation7], 1
    %145 = vsyncpa [#allocation5], 1

</llo_original>
